<compile_context>
chip_gen: v6e
topology: v6e:2x2x1
jax: 0.10.0
libtpu: 0.0.40
codegen_flags: <defaults>
</compile_context>

<pallas_src>
import jax
import jax.numpy as jnp
from jax.experimental import pallas as pl
from jax.experimental.pallas import tpu as pltpu


def _make_layer_kernel(n, dp, d):
    inv_d = 1.0 / float(d)

    def kernel(edges_ref, feat_ref, w_ref, params_ref, mask_ref, out_ref):
        e = edges_ref[...]                               # (n, n)
        x = feat_ref[...]                                # (n, d)

        # GraphConv aggregation: A @ x with A = (e + e^T)/2 + I.
        # Symmetrize once (XLU transpose rides a free slot), single MXU matmul.
        e_sym = 0.5 * (e + e.T)                          # (n, n)
        h = jnp.dot(e_sym, x, preferred_element_type=jnp.float32) + x  # (n, d)

        # Linear: h @ W^T (padded on the output dim) + b -> lane-dense (n, dp).
        h = jnp.dot(h, w_ref[...], preferred_element_type=jnp.float32)

        params = params_ref[...]                         # (3, dp)
        bias = params[0:1, :]
        gamma = params[1:2, :]
        beta = params[2:3, :]
        h = h + bias

        # masked_fill(feat_mask[..., None], 0): exact where-semantics.
        h = jnp.where(mask_ref[...] > 0.0, 0.0, h)       # mask (n,1) broadcast

        # LayerNorm over the true feature width d (padded lanes masked out for
        # both mean and variance).
        lane = jax.lax.broadcasted_iota(jnp.int32, (1, dp), 1)
        valid = lane < d
        hv = jnp.where(valid, h, 0.0)
        mu = jnp.sum(hv, axis=-1, keepdims=True) * inv_d
        diff = jnp.where(valid, h - mu, 0.0)
        var = jnp.sum(diff * diff, axis=-1, keepdims=True) * inv_d
        hn = diff * jax.lax.rsqrt(var + 1e-5)
        hn = hn * gamma + beta

        # activation: ReLU
        out_ref[...] = jnp.maximum(hn, 0.0)

    return kernel


def make_layer_params(w, bias, gamma, beta):
    """Pad/pack parameters ONCE at layer init (not per forward call).

    Returns:
      w_p:    (d, dp) = W^T zero-padded on its output dim to a 128 multiple.
      params: (3, dp) = stacked [bias, gamma, beta], zero-padded.
    """
    d = w.shape[0]
    dp = ((d + 127) // 128) * 128
    pad = dp - d
    w_p = jnp.pad(w.T, ((0, 0), (0, pad)))               # (d, dp)
    params = jnp.stack([jnp.pad(bias, (0, pad)),
                        jnp.pad(gamma, (0, pad)),
                        jnp.pad(beta, (0, pad))])         # (3, dp)
    return w_p, params


def layer_forward(edges, feat, feat_mask, w_p, params, *, trim=True):
    bs, n, d = feat.shape
    dp = w_p.shape[1]

    if feat_mask is None:
        mask_f = jnp.zeros((bs, n, 1), jnp.float32)
    else:
        mask_f = feat_mask.astype(jnp.float32).reshape(bs, n, 1)

    kernel = _make_layer_kernel(n, dp, d)

    out = pl.pallas_call(
        kernel,
        out_shape=jax.ShapeDtypeStruct((bs, n, dp), jnp.float32),
        grid=(bs,),
        in_specs=[
            pl.BlockSpec((None, n, n), lambda b: (b, 0, 0)),   # edges (per batch)
            pl.BlockSpec((None, n, d), lambda b: (b, 0, 0)),   # feat (unpadded)
            pl.BlockSpec((d, dp), lambda b: (0, 0)),           # W^T (padded out-dim)
            pl.BlockSpec((3, dp), lambda b: (0, 0)),           # bias/gamma/beta packed
            pl.BlockSpec((None, n, 1), lambda b: (b, 0, 0)),   # feat_mask
        ],
        out_specs=pl.BlockSpec((None, n, dp), lambda b: (b, 0, 0)),
        compiler_params=pltpu.CompilerParams(
            dimension_semantics=("parallel",)),                # both TCs on v7x
    )(edges, feat, w_p, params, mask_f)

    if trim:
        # Optional: downstream code that tolerates lane-padding can pass
        # trim=False and skip this extra XLA slice/copy.
        out = out[..., :d]
    return out


def layer_reference(edges, feat, w_t, bias, gamma, beta, mask_b):
    """Pure-JAX reference for validation."""
    n = edges.shape[-1]
    adj = edges + jnp.swapaxes(edges, 1, 2)
    a_mat = adj * 0.5 + jnp.eye(n, dtype=edges.dtype)[None]
    h = jnp.einsum("bij,bjd->bid", a_mat, feat)
    h = h @ w_t + bias
    h = jnp.where(mask_b[..., None], 0.0, h)
    mu = jnp.mean(h, axis=-1, keepdims=True)
    var = jnp.mean((h - mu) ** 2, axis=-1, keepdims=True)
    h = (h - mu) / jnp.sqrt(var + 1e-5)
    h = h * gamma + beta
    return jnp.maximum(h, 0.0)


if __name__ == "__main__":
    bs, n, d = 2, 8, 32

    key = jax.random.PRNGKey(0)
    k_e, k_f, k_w, k_b, k_m = jax.random.split(key, 5)

    edges = jax.random.uniform(k_e, (bs, n, n), dtype=jnp.float32)
    feat = jax.random.normal(k_f, (bs, n, d), dtype=jnp.float32)

    # nn.Linear(D, D): xavier_uniform_ weight, normal_ bias (deterministic init)
    bound = (6.0 / (d + d)) ** 0.5
    w = jax.random.uniform(k_w, (d, d), minval=-bound, maxval=bound,
                           dtype=jnp.float32)              # PyTorch weight (out, in)
    bias = jax.random.normal(k_b, (d,), dtype=jnp.float32)

    # LayerNorm affine params (PyTorch default init)
    gamma = jnp.ones((d,), dtype=jnp.float32)
    beta = jnp.zeros((d,), dtype=jnp.float32)

    # feat_mask: bool [bs, n], True -> zero-out row before norm
    mask_b = jax.random.bernoulli(k_m, 0.25, (bs, n))

    # One-time parameter padding/packing (hoisted out of the per-call path).
    w_p, params = make_layer_params(w, bias, gamma, beta)

    out = layer_forward(edges, feat, mask_b, w_p, params)
    out = jax.block_until_ready(out)

    ref = layer_reference(edges, feat, w.T, bias, gamma, beta, mask_b)
    assert out.shape == ref.shape, "shape mismatch vs reference"
    assert jnp.allclose(out, ref, atol=1e-4, rtol=1e-4), "mismatch vs reference"

    print("KERNEL_OK")
</pallas_src>

<mosaic_0001>
module attributes {stable_mosaic.version = 11 : i64} {
  func.func @kernel(%arg0: i32, %arg1: memref<1x8x8xf32, #tpu.memory_space<vmem>>, %arg2: memref<1x8x32xf32, #tpu.memory_space<vmem>>, %arg3: memref<32x128xf32, #tpu.memory_space<vmem>>, %arg4: memref<3x128xf32, #tpu.memory_space<vmem>>, %arg5: memref<1x8x1xf32, #tpu.memory_space<vmem>>, %arg6: memref<1x8x128xf32, #tpu.memory_space<vmem>>) attributes {dimension_semantics = [#tpu.dimension_semantics<parallel>], iteration_bounds = array<i64: 2>, scalar_prefetch = 0 : i64, scratch_operands = 0 : i64, tpu.core_type = #tpu.core_type<tc>, window_params = [{transform_indices = @transform_0, window_bounds = array<i64: 1, 8, 8>}, {transform_indices = @transform_1, window_bounds = array<i64: 1, 8, 32>}, {pipeline_mode = #tpu.pipeline_mode<synchronous>, transform_indices = @transform_2, window_bounds = array<i64: 32, 128>}, {pipeline_mode = #tpu.pipeline_mode<synchronous>, transform_indices = @transform_3, window_bounds = array<i64: 3, 128>}, {transform_indices = @transform_4, window_bounds = array<i64: 1, 8, 1>}, {transform_indices = @transform_5, window_bounds = array<i64: 1, 8, 128>}]} {
    %c0 = arith.constant 0 : index
    %c0_0 = arith.constant 0 : index
    %c0_1 = arith.constant 0 : index
    %0 = vector.load %arg1[%c0, %c0_0, %c0_1] : memref<1x8x8xf32, #tpu.memory_space<vmem>>, vector<1x8x8xf32>
    %1 = vector.shape_cast %0 : vector<1x8x8xf32> to vector<8x8xf32>
    %c0_2 = arith.constant 0 : index
    %c0_3 = arith.constant 0 : index
    %c0_4 = arith.constant 0 : index
    %2 = vector.load %arg2[%c0_2, %c0_3, %c0_4] : memref<1x8x32xf32, #tpu.memory_space<vmem>>, vector<1x8x32xf32>
    %3 = vector.shape_cast %2 : vector<1x8x32xf32> to vector<8x32xf32>
    %4 = tpu.transpose %1, [1, 0] : vector<8x8xf32> -> vector<8x8xf32>
    %5 = arith.addf %1, %4 : vector<8x8xf32>
    %cst = arith.constant 5.000000e-01 : f32
    %6 = vector.broadcast %cst : f32 to vector<8x8xf32>
    %7 = arith.mulf %6, %5 : vector<8x8xf32>
    %cst_5 = arith.constant dense<0.000000e+00> : vector<8x32xf32>
    %8 = tpu.matmul %7, %3, %cst_5 {dimension_numbers = #tpu.dot_dimension_numbers<[1], [0], [0], [1], [0, 0, 1, 1], [], []>} : vector<8x8xf32>, vector<8x32xf32>, vector<8x32xf32> -> vector<8x32xf32>
    %9 = arith.addf %8, %3 : vector<8x32xf32>
    %c0_6 = arith.constant 0 : index
    %c0_7 = arith.constant 0 : index
    %10 = vector.load %arg3[%c0_6, %c0_7] : memref<32x128xf32, #tpu.memory_space<vmem>>, vector<32x128xf32>
    %cst_8 = arith.constant dense<0.000000e+00> : vector<8x128xf32>
    %11 = tpu.matmul %9, %10, %cst_8 {dimension_numbers = #tpu.dot_dimension_numbers<[1], [0], [0], [1], [0, 0, 1, 1], [], []>} : vector<8x32xf32>, vector<32x128xf32>, vector<8x128xf32> -> vector<8x128xf32>
    %c0_9 = arith.constant 0 : index
    %c0_10 = arith.constant 0 : index
    %12 = vector.load %arg4[%c0_9, %c0_10] : memref<3x128xf32, #tpu.memory_space<vmem>>, vector<3x128xf32>
    %13 = vector.extract_strided_slice %12 {offsets = [0, 0], sizes = [1, 128], strides = [1, 1]} : vector<3x128xf32> to vector<1x128xf32>
    %14 = vector.extract_strided_slice %12 {offsets = [1, 0], sizes = [1, 128], strides = [1, 1]} : vector<3x128xf32> to vector<1x128xf32>
    %15 = vector.extract_strided_slice %12 {offsets = [2, 0], sizes = [1, 128], strides = [1, 1]} : vector<3x128xf32> to vector<1x128xf32>
    %16 = vector.broadcast %13 : vector<1x128xf32> to vector<8x128xf32>
    %17 = arith.addf %11, %16 : vector<8x128xf32>
    %c0_11 = arith.constant 0 : index
    %c0_12 = arith.constant 0 : index
    %c0_13 = arith.constant 0 : index
    %18 = vector.load %arg5[%c0_11, %c0_12, %c0_13] : memref<1x8x1xf32, #tpu.memory_space<vmem>>, vector<1x8x1xf32>
    %19 = vector.shape_cast %18 : vector<1x8x1xf32> to vector<8x1xf32>
    %cst_14 = arith.constant 0.000000e+00 : f32
    %20 = vector.broadcast %cst_14 : f32 to vector<8x1xf32>
    %21 = arith.cmpf ogt, %19, %20 : vector<8x1xf32>
    %cst_15 = arith.constant 0.000000e+00 : f32
    %22 = vector.shape_cast %21 : vector<8x1xi1> to vector<8x1xi1>
    %23 = vector.broadcast %22 : vector<8x1xi1> to vector<8x128xi1>
    %24 = vector.broadcast %cst_15 : f32 to vector<8x128xf32>
    %25 = arith.select %23, %24, %17 : vector<8x128xi1>, vector<8x128xf32>
    %26 = tpu.iota {dimensions = array<i32: 1>} : vector<1x128xi32>
    %c32_i32 = arith.constant 32 : i32
    %27 = vector.broadcast %c32_i32 : i32 to vector<1x128xi32>
    %28 = arith.cmpi slt, %26, %27 : vector<1x128xi32>
    %cst_16 = arith.constant 0.000000e+00 : f32
    %29 = vector.shape_cast %28 : vector<1x128xi1> to vector<1x128xi1>
    %30 = vector.broadcast %29 : vector<1x128xi1> to vector<8x128xi1>
    %31 = vector.broadcast %cst_16 : f32 to vector<8x128xf32>
    %32 = arith.select %30, %25, %31 : vector<8x128xi1>, vector<8x128xf32>
    %cst_17 = arith.constant dense<0.000000e+00> : vector<8xf32>
    %33 = vector.multi_reduction <add>, %32, %cst_17 [1] : vector<8x128xf32> to vector<8xf32>
    %34 = vector.shape_cast %33 : vector<8xf32> to vector<8x1xf32>
    %cst_18 = arith.constant 3.125000e-02 : f32
    %35 = vector.broadcast %cst_18 : f32 to vector<8x1xf32>
    %36 = arith.mulf %34, %35 : vector<8x1xf32>
    %37 = vector.broadcast %36 : vector<8x1xf32> to vector<8x128xf32>
    %38 = arith.subf %25, %37 : vector<8x128xf32>
    %cst_19 = arith.constant 0.000000e+00 : f32
    %39 = vector.shape_cast %28 : vector<1x128xi1> to vector<1x128xi1>
    %40 = vector.broadcast %39 : vector<1x128xi1> to vector<8x128xi1>
    %41 = vector.broadcast %cst_19 : f32 to vector<8x128xf32>
    %42 = arith.select %40, %38, %41 : vector<8x128xi1>, vector<8x128xf32>
    %43 = arith.mulf %42, %42 : vector<8x128xf32>
    %cst_20 = arith.constant dense<0.000000e+00> : vector<8xf32>
    %44 = vector.multi_reduction <add>, %43, %cst_20 [1] : vector<8x128xf32> to vector<8xf32>
    %45 = vector.shape_cast %44 : vector<8xf32> to vector<8x1xf32>
    %cst_21 = arith.constant 3.125000e-02 : f32
    %46 = vector.broadcast %cst_21 : f32 to vector<8x1xf32>
    %47 = arith.mulf %45, %46 : vector<8x1xf32>
    %cst_22 = arith.constant 9.99999974E-6 : f32
    %48 = vector.broadcast %cst_22 : f32 to vector<8x1xf32>
    %49 = arith.addf %47, %48 : vector<8x1xf32>
    %50 = math.rsqrt %49 : vector<8x1xf32>
    %51 = vector.broadcast %50 : vector<8x1xf32> to vector<8x128xf32>
    %52 = arith.mulf %42, %51 : vector<8x128xf32>
    %53 = vector.broadcast %14 : vector<1x128xf32> to vector<8x128xf32>
    %54 = arith.mulf %52, %53 : vector<8x128xf32>
    %55 = vector.broadcast %15 : vector<1x128xf32> to vector<8x128xf32>
    %56 = arith.addf %54, %55 : vector<8x128xf32>
    %cst_23 = arith.constant 0.000000e+00 : f32
    %57 = vector.broadcast %cst_23 : f32 to vector<8x128xf32>
    %58 = arith.maximumf %56, %57 : vector<8x128xf32>
    %c0_24 = arith.constant 0 : index
    %c0_25 = arith.constant 0 : index
    %c0_26 = arith.constant 0 : index
    %59 = vector.load %arg6[%c0_24, %c0_25, %c0_26] : memref<1x8x128xf32, #tpu.memory_space<vmem>>, vector<1x8x128xf32>
    %60 = vector.shape_cast %59 : vector<1x8x128xf32> to vector<8x128xf32>
    %61 = vector.shape_cast %58 : vector<8x128xf32> to vector<1x8x128xf32>
    tpu.vector_store %arg6[%c0_24, %c0_25, %c0_26], %61 {strides = array<i32>} : memref<1x8x128xf32, #tpu.memory_space<vmem>>, vector<1x8x128xf32>,
    return
  }
  func.func @transform_0(%arg0: i32) -> (i32, i32, i32) {
    %c0_i32 = arith.constant 0 : i32
    %c0_i32_0 = arith.constant 0 : i32
    %c0_i32_1 = arith.constant 0 : i32
    return %arg0, %c0_i32, %c0_i32_0 : i32, i32, i32
  }
  func.func @transform_1(%arg0: i32) -> (i32, i32, i32) {
    %c0_i32 = arith.constant 0 : i32
    %c0_i32_0 = arith.constant 0 : i32
    %c0_i32_1 = arith.constant 0 : i32
    return %arg0, %c0_i32, %c0_i32_0 : i32, i32, i32
  }
  func.func @transform_2(%arg0: i32) -> (i32, i32) {
    %c0_i32 = arith.constant 0 : i32
    %c0_i32_0 = arith.constant 0 : i32
    %c0_i32_1 = arith.constant 0 : i32
    return %c0_i32, %c0_i32_0 : i32, i32
  }
  func.func @transform_3(%arg0: i32) -> (i32, i32) {
    %c0_i32 = arith.constant 0 : i32
    %c0_i32_0 = arith.constant 0 : i32
    %c0_i32_1 = arith.constant 0 : i32
    return %c0_i32, %c0_i32_0 : i32, i32
  }
  func.func @transform_4(%arg0: i32) -> (i32, i32, i32) {
    %c0_i32 = arith.constant 0 : i32
    %c0_i32_0 = arith.constant 0 : i32
    %c0_i32_1 = arith.constant 0 : i32
    return %arg0, %c0_i32, %c0_i32_0 : i32, i32, i32
  }
  func.func @transform_5(%arg0: i32) -> (i32, i32, i32) {
    %c0_i32 = arith.constant 0 : i32
    %c0_i32_0 = arith.constant 0 : i32
    %c0_i32_1 = arith.constant 0 : i32
    return %arg0, %c0_i32, %c0_i32_0 : i32, i32, i32
  }
}

</mosaic_0001>

<llo_original>
// kernel: tpu_custom_call.1
$region0: #{tpu_custom_call.1}
  #allocation0 [shape = 'u32[]', space=smem, size = 0x4, offset = 0x4, fixed_abs, tag = 'smem constant byte address 0x4 - core index']
  #allocation1 [shape = 'u32[144,128]{1,0:T(1,128)}', space=vmem, size = 0x12000, scoped, tag = 'internal scratch']
  %s0 = inlined_call_operand.vmem [shape: f32[2,8,8], index: 0, kind: input, shape index: {}]
  %s1 = inlined_call_operand.hbm [shape: f32[2,8,32], index: 1, kind: input, shape index: {}]
  %s2 = inlined_call_operand.hbm [shape: f32[32,128], index: 2, kind: input, shape index: {}]
  %s3 = inlined_call_operand.vmem [shape: f32[3,128], index: 3, kind: input, shape index: {}]
  %s4 = inlined_call_operand.vmem [shape: f32[2,8,1], index: 4, kind: input, shape index: {}]
  %s5 = inlined_call_operand.hbm [shape: f32[2,8,128], index: 5, kind: output, shape index: {}]
  %s6 = sld [smem:[#allocation0]]
  $region61: #{tpu_custom_call.1} parent=0
    _
  %s8 = ssub.s32 1, %s6
  %s9 = scalar_select 0, %s8, %s6
  $region1: #{tpu_custom_call.1} parent=0
    #allocation2 [shape = 'u8[8192]{0}', space=vmem, size = 0x2000, scoped, tag = 'input window, operand 1']
    #allocation3 [shape = 's32[2]{0}', space=sflag, size = 0x8, scoped, tag = 'scoped memory for tpu_custom_call.1']
    #allocation4 [shape = 's32[2]{0}', space=sflag, size = 0x8, scoped, tag = 'scoped memory for tpu_custom_call.1']
    #allocation5 [shape = 'u8[16384]{0}', space=vmem, size = 0x4000, scoped, tag = 'input window, operand 2, single buffered']
    #allocation6 [shape = 's32[1]{0}', space=sflag, size = 0x4, scoped, tag = 'scoped memory for tpu_custom_call.1']
    #allocation7 [shape = 'u8[8192]{0}', space=vmem, size = 0x2000, scoped, tag = 'output window, operand 0']
    %10 = vsyncpa [#allocation3], 0
    %s11 = scalar_lea.sflag [#allocation3], 1
    %12 = vsyncpa %s11, 0
    %13 = vsyncpa [#allocation6], 0
    %14 = vsyncpa [#allocation4], 0
    %s15 = scalar_lea.sflag [#allocation4], 1
    %16 = vsyncpa %s15, 0
    loop: start=0, step=1, limit=4
    $region2: #{tpu_custom_call.1} parent=1 // loop_pre_header
      _
    $region3: #{tpu_custom_call.1} parent=1 // loop_header
      %s18 = sphi 0, %s22
      %p19 = scmp.ge.s32.totalorder %s18, 4
      %s28 = sphi 0, %s30
      %s31 = sphi 0, %s28
      %s32 = sphi 0, %s31
      %s48 = sphi 0, %s32
      %s54 = sphi 0, %s56
      %s57 = sphi 0, %s54
      %s58 = sphi 0, %s57
      %s74 = sphi 0, %s58
      %s78 = sphi 0, %s78
      %s80 = sphi 0, %s78
      %s81 = sphi 0, %s80
      %s95 = sphi 0, %s81
      %s99 = sphi 0, %s99
      %s101 = sphi 0, %s99
      %s102 = sphi 0, %s101
      %s116 = sphi 0, %s102
      %s122 = sphi 0, %s124
      %s125 = sphi 0, %s122
      %s126 = sphi 0, %s125
      %s142 = sphi 0, %s126
      %s148 = sphi 0, %s150
      %s151 = sphi 0, %s148
      %s152 = sphi 0, %s151
      %s168 = sphi 0, %s152
    $region4: #{tpu_custom_call.1} parent=1 // loop_header_branch
      %21 = sbr.rel (%p19) target = $region8
    $region5: #{tpu_custom_call.1} parent=1 // loop_body
      %s23 = ssub.s32 %s18, 1
      %s24 = ssub.s32 %s18, 2
      %s25 = sadd.s32 %s18, 1
      %s26 = ssub.s32 %s18, %s25
      %p27 = scmp.eq.s32.totalorder %s26, 0
      %s29 = sadd.s32 %s28, 1
      %s30 = scalar_select %p27, %s28, %s29
      %p33 = pneg %p27
      %p34 = scmp.eq.s32.totalorder %s18, 1
      %p35 = por %p33, %p34
      %p36 = scmp.ne.s32.totalorder %s28, %s31
      %p37 = scmp.eq.s32.totalorder %s18, 0
      %p38 = por %p36, %p37
      %p39 = scmp.ne.s32.totalorder %s28, %s31
      %p40 = scmp.eq.s32.totalorder %s23, 1
      %p41 = por %p39, %p40
      %p42 = scmp.ne.s32.totalorder %s31, %s32
      %p43 = scmp.eq.s32.totalorder %s23, 0
      %p44 = por %p42, %p43
      %p45 = scmp.ne.s32.totalorder %s31, %s32
      %p46 = scmp.eq.s32.totalorder %s24, 1
      %p47 = por %p45, %p46
      %p49 = scmp.ne.s32.totalorder %s32, %s48
      %p50 = scmp.eq.s32.totalorder %s24, 0
      %p51 = por %p49, %p50
      %s52 = ssub.s32 %s18, %s25
      %p53 = scmp.eq.s32.totalorder %s52, 0
      %s55 = sadd.s32 %s54, 1
      %s56 = scalar_select %p53, %s54, %s55
      %p59 = pneg %p53
      %p60 = scmp.eq.s32.totalorder %s18, 1
      %p61 = por %p59, %p60
      %p62 = scmp.ne.s32.totalorder %s54, %s57
      %p63 = scmp.eq.s32.totalorder %s18, 0
      %p64 = por %p62, %p63
      %p65 = scmp.ne.s32.totalorder %s54, %s57
      %p66 = scmp.eq.s32.totalorder %s23, 1
      %p67 = por %p65, %p66
      %p68 = scmp.ne.s32.totalorder %s57, %s58
      %p69 = scmp.eq.s32.totalorder %s23, 0
      %p70 = por %p68, %p69
      %p71 = scmp.ne.s32.totalorder %s57, %s58
      %p72 = scmp.eq.s32.totalorder %s24, 1
      %p73 = por %p71, %p72
      %p75 = scmp.ne.s32.totalorder %s58, %s74
      %p76 = scmp.eq.s32.totalorder %s24, 0
      %p77 = por %p75, %p76
      %s79 = sadd.s32 %s78, 1
      %p82 = scmp.eq.s32.totalorder %s18, 1
      %p83 = scmp.ne.s32.totalorder %s78, %s80
      %p84 = scmp.eq.s32.totalorder %s18, 0
      %p85 = por %p83, %p84
      %p86 = scmp.ne.s32.totalorder %s78, %s80
      %p87 = scmp.eq.s32.totalorder %s23, 1
      %p88 = por %p86, %p87
      %p89 = scmp.ne.s32.totalorder %s80, %s81
      %p90 = scmp.eq.s32.totalorder %s23, 0
      %p91 = por %p89, %p90
      %p92 = scmp.ne.s32.totalorder %s80, %s81
      %p93 = scmp.eq.s32.totalorder %s24, 1
      %p94 = por %p92, %p93
      %p96 = scmp.ne.s32.totalorder %s81, %s95
      %p97 = scmp.eq.s32.totalorder %s24, 0
      %p98 = por %p96, %p97
      %s100 = sadd.s32 %s99, 1
      %p103 = scmp.eq.s32.totalorder %s18, 1
      %p104 = scmp.ne.s32.totalorder %s99, %s101
      %p105 = scmp.eq.s32.totalorder %s18, 0
      %p106 = por %p104, %p105
      %p107 = scmp.ne.s32.totalorder %s99, %s101
      %p108 = scmp.eq.s32.totalorder %s23, 1
      %p109 = por %p107, %p108
      %p110 = scmp.ne.s32.totalorder %s101, %s102
      %p111 = scmp.eq.s32.totalorder %s23, 0
      %p112 = por %p110, %p111
      %p113 = scmp.ne.s32.totalorder %s101, %s102
      %p114 = scmp.eq.s32.totalorder %s24, 1
      %p115 = por %p113, %p114
      %p117 = scmp.ne.s32.totalorder %s102, %s116
      %p118 = scmp.eq.s32.totalorder %s24, 0
      %p119 = por %p117, %p118
      %s120 = ssub.s32 %s18, %s25
      %p121 = scmp.eq.s32.totalorder %s120, 0
      %s123 = sadd.s32 %s122, 1
      %s124 = scalar_select %p121, %s122, %s123
      %p127 = pneg %p121
      %p128 = scmp.eq.s32.totalorder %s18, 1
      %p129 = por %p127, %p128
      %p130 = scmp.ne.s32.totalorder %s122, %s125
      %p131 = scmp.eq.s32.totalorder %s18, 0
      %p132 = por %p130, %p131
      %p133 = scmp.ne.s32.totalorder %s122, %s125
      %p134 = scmp.eq.s32.totalorder %s23, 1
      %p135 = por %p133, %p134
      %p136 = scmp.ne.s32.totalorder %s125, %s126
      %p137 = scmp.eq.s32.totalorder %s23, 0
      %p138 = por %p136, %p137
      %p139 = scmp.ne.s32.totalorder %s125, %s126
      %p140 = scmp.eq.s32.totalorder %s24, 1
      %p141 = por %p139, %p140
      %p143 = scmp.ne.s32.totalorder %s126, %s142
      %p144 = scmp.eq.s32.totalorder %s24, 0
      %p145 = por %p143, %p144
      %s146 = ssub.s32 %s18, %s25
      %p147 = scmp.eq.s32.totalorder %s146, 0
      %s149 = sadd.s32 %s148, 1
      %s150 = scalar_select %p147, %s148, %s149
      %p153 = pneg %p147
      %p154 = scmp.eq.s32.totalorder %s18, 1
      %p155 = por %p153, %p154
      %p156 = scmp.ne.s32.totalorder %s148, %s151
      %p157 = scmp.eq.s32.totalorder %s18, 0
      %p158 = por %p156, %p157
      %p159 = scmp.ne.s32.totalorder %s148, %s151
      %p160 = scmp.eq.s32.totalorder %s23, 1
      %p161 = por %p159, %p160
      %p162 = scmp.ne.s32.totalorder %s151, %s152
      %p163 = scmp.eq.s32.totalorder %s23, 0
      %p164 = por %p162, %p163
      %p165 = scmp.ne.s32.totalorder %s151, %s152
      %p166 = scmp.eq.s32.totalorder %s24, 1
      %p167 = por %p165, %p166
      %p169 = scmp.ne.s32.totalorder %s152, %s168
      %p170 = scmp.eq.s32.totalorder %s24, 0
      %p171 = por %p169, %p170
      %p172 = scmp.le.s32.totalorder 1, %s18
      %p173 = scmp.lt.s32.totalorder %s18, 3
      %p174 = pnand %p172, %p173
      %p175 = pneg %p174
      // Predicated region
      $region9: #{tpu_custom_call.1} parent=5 // pred_check
        _
      $region10: #{tpu_custom_call.1} parent=5 // pred_check_branch
        %177 = sbr.rel (%p174) target = $region12
      $region11: #{tpu_custom_call.1} parent=5 // pred_region
        %s178 = ssub.s32 %s18, 1
        // Predicated region
        $region13: #{tpu_custom_call.1} parent=11 // pred_check
          %p179 = pneg %p91
        $region14: #{tpu_custom_call.1} parent=11 // pred_check_branch
          %181 = sbr.rel (%p179) target = $region16
        $region15: #{tpu_custom_call.1} parent=11 // pred_region
          %s183 = ssub.s32 512, 512
          %184 = vsyncadd [#allocation6], %s183
          %s185 = sshll.u32 [#allocation5], 4
          %s186 = int_to_ptr.vmem [resolvable:$true] %s185
          %191 = dma.hbm_to_vmem [thread:$0]  %s2, 512, %s186, [#allocation6], 128, 128, 8
        $region16: #{tpu_custom_call.1} parent=11 // pred_fallthru
          _
        // Predicated region
        $region17: #{tpu_custom_call.1} parent=11 // pred_check
          %p192 = pneg %p112
        $region18: #{tpu_custom_call.1} parent=11 // pred_check_branch
          %194 = sbr.rel (%p192) target = $region20
        $region19: #{tpu_custom_call.1} parent=11 // pred_region
          _
        $region20: #{tpu_custom_call.1} parent=11 // pred_fallthru
          _
      $region12: #{tpu_custom_call.1} parent=5 // pred_fallthru
        _
      %p195 = scmp.lt.s32.totalorder %s18, 2
      // Predicated region
      $region21: #{tpu_custom_call.1} parent=5 // pred_check
        %p196 = pneg %p195
      $region22: #{tpu_custom_call.1} parent=5 // pred_check_branch
        %198 = sbr.rel (%p196) target = $region24
      $region23: #{tpu_custom_call.1} parent=5 // pred_region
        // Predicated region
        $region25: #{tpu_custom_call.1} parent=23 // pred_check
          %p199 = pneg %p38
        $region26: #{tpu_custom_call.1} parent=23 // pred_check_branch
          %201 = sbr.rel (%p199) target = $region28
        $region27: #{tpu_custom_call.1} parent=23 // pred_region
          %p202 = scmp.lt.s32.totalorder %s18, 1
          %s203 = scalar_select %p202, %s18, 1
          %s204 = smul.addr %s203, 8
          %s205 = scalar_lea.vmem %s0, %s204
        $region28: #{tpu_custom_call.1} parent=23 // pred_fallthru
          _
        // Predicated region
        $region29: #{tpu_custom_call.1} parent=23 // pred_check
          %p206 = pneg %p64
        $region30: #{tpu_custom_call.1} parent=23 // pred_check_branch
          %208 = sbr.rel (%p206) target = $region32
        $region31: #{tpu_custom_call.1} parent=23 // pred_region
          %s209 = sand.u32 %s54, 1
          %s210 = scalar_lea.sflag [#allocation3], %s209
          %s211 = sand.u32 %s54, 1
          %s212 = smul.addr %s211, 8
          %s213 = scalar_lea.vmem [#allocation2], %s212
          %s215 = ssub.s32 128, 128
          %216 = vsyncadd %s210, %s215
          %s217 = smul.addr %s18, 128
          %s218 = scalar_lea.hbm %s1, %s217
          %s220 = sshll.u32 %s213, 4
          %s221 = int_to_ptr.vmem [resolvable:$true] %s220
          %223 = dma.hbm_to_vmem [thread:$0]  %s218, 128, %s221, %s210
        $region32: #{tpu_custom_call.1} parent=23 // pred_fallthru
          _
        // Predicated region
        $region33: #{tpu_custom_call.1} parent=23 // pred_check
          %p224 = pneg %p132
        $region34: #{tpu_custom_call.1} parent=23 // pred_check_branch
          %226 = sbr.rel (%p224) target = $region36
        $region35: #{tpu_custom_call.1} parent=23 // pred_region
          %p227 = scmp.lt.s32.totalorder %s18, 1
          %s228 = scalar_select %p227, %s18, 1
          %s229 = smul.addr %s228, 8
          %s230 = scalar_lea.vmem %s4, %s229
        $region36: #{tpu_custom_call.1} parent=23 // pred_fallthru
          _
      $region24: #{tpu_custom_call.1} parent=5 // pred_fallthru
        _
      %p231 = scmp.le.s32.totalorder 1, %s18
      %p232 = scmp.lt.s32.totalorder %s18, 3
      %p233 = pnand %p231, %p232
      %p234 = pneg %p233
      // Predicated region
      $region37: #{tpu_custom_call.1} parent=5 // pred_check
        _
      $region38: #{tpu_custom_call.1} parent=5 // pred_check_branch
        %236 = sbr.rel (%p233) target = $region40
      $region39: #{tpu_custom_call.1} parent=5 // pred_region
        %s237 = ssub.s32 %s18, 1
        %s238 = sand.u32 %s57, 1
        %s239 = scalar_lea.sflag [#allocation3], %s238
        %s240 = sand.u32 %s57, 1
        %s241 = smul.addr %s240, 8
        %s242 = scalar_lea.vmem [#allocation2], %s241
        // Predicated region
        $region41: #{tpu_custom_call.1} parent=39 // pred_check
          %p243 = pneg %p70
        $region42: #{tpu_custom_call.1} parent=39 // pred_check_branch
          %245 = sbr.rel (%p243) target = $region44
        $region43: #{tpu_custom_call.1} parent=39 // pred_region
          %246 = dma.done %s239, 128
        $region44: #{tpu_custom_call.1} parent=39 // pred_fallthru
          _
        // Predicated region
        $region45: #{tpu_custom_call.1} parent=39 // pred_check
          %p247 = pneg %p91
        $region46: #{tpu_custom_call.1} parent=39 // pred_check_branch
          %249 = sbr.rel (%p247) target = $region48
        $region47: #{tpu_custom_call.1} parent=39 // pred_region
          %250 = dma.done [#allocation6], 512
        $region48: #{tpu_custom_call.1} parent=39 // pred_fallthru
          _
        %p251 = scmp.lt.s32.totalorder %s23, 1
        %s252 = scalar_select %p251, %s23, 1
        %s253 = smul.addr %s252, 8
        %s254 = scalar_lea.vmem %s0, %s253
        %p255 = pneg %p44
        %p256 = pneg %p41
        %s257 = sand.u32 %s57, 1
        %s258 = scalar_lea.sflag [#allocation3], %s257
        %s259 = sand.u32 %s57, 1
        %s260 = smul.addr %s259, 8
        %s261 = scalar_lea.vmem [#allocation2], %s260
        %p262 = pneg %p70
        %p263 = pneg %p67
        %p264 = pneg %p91
        %p265 = pneg %p88
        %p266 = pneg %p112
        %p267 = pneg %p109
        %p268 = scmp.lt.s32.totalorder %s23, 1
        %s269 = scalar_select %p268, %s23, 1
        %s270 = smul.addr %s269, 8
        %s271 = scalar_lea.vmem %s4, %s270
        %p272 = pneg %p138
        %p273 = pneg %p135
        %p274 = pneg %p164
        %p275 = pneg %p161
        %s276 = sand.u32 %s151, 1
        %s277 = scalar_lea.sflag [#allocation4], %s276
        %s278 = sand.u32 %s151, 1
        %s279 = smul.addr %s278, 8
        %s280 = scalar_lea.vmem [#allocation7], %s279
        %p281 = scmp.lt.s32.totalorder %s23, 1
        %s282 = scalar_select %p281, %s23, 1
        %s283 = smul.addr %s282, 8
        %s284 = scalar_lea.vmem %s0, %s283
        %p285 = scmp.lt.s32.totalorder %s23, 1
        %s286 = scalar_select %p285, %s23, 1
        %s287 = smul.addr %s286, 8
        %s288 = scalar_lea.vmem %s4, %s287
        %v289 = vld [vmem:[%s284] sm:$0xff]
        %v290 = vld [vmem:[%s242] sm:$0xff]
        %291 = vxpose.xlu0.b32.start [1/16] %v289, 128
        %292 = vxpose.xlu0.b32.cont [2/16] 0.0, 128
        %293 = vxpose.xlu0.b32.cont [3/16] 0.0, 128
        %294 = vxpose.xlu0.b32.cont [4/16] 0.0, 128
        %295 = vxpose.xlu0.b32.cont [5/16] 0.0, 128
        %296 = vxpose.xlu0.b32.cont [6/16] 0.0, 128
        %297 = vxpose.xlu0.b32.cont [7/16] 0.0, 128
        %298 = vxpose.xlu0.b32.cont [8/16] 0.0, 128
        %299 = vxpose.xlu0.b32.cont [9/16] 0.0, 128
        %300 = vxpose.xlu0.b32.cont [10/16] 0.0, 128
        %301 = vxpose.xlu0.b32.cont [11/16] 0.0, 128
        %302 = vxpose.xlu0.b32.cont [12/16] 0.0, 128
        %303 = vxpose.xlu0.b32.cont [13/16] 0.0, 128
        %304 = vxpose.xlu0.b32.cont [14/16] 0.0, 128
        %305 = vxpose.xlu0.b32.cont [15/16] 0.0, 128
        %306 = vxpose.xlu0.b32.end [16/16] 0.0, 128
        %v307 = vpop.trf.xlu0
        %v308 = vpop.trf.xlu0
        %v309 = vpop.trf.xlu0
        %v310 = vpop.trf.xlu0
        %v311 = vpop.trf.xlu0
        %v312 = vpop.trf.xlu0
        %v313 = vpop.trf.xlu0
        %v314 = vpop.trf.xlu0
        %v315 = vpop.trf.xlu0
        %v316 = vpop.trf.xlu0
        %v317 = vpop.trf.xlu0
        %v318 = vpop.trf.xlu0
        %v319 = vpop.trf.xlu0
        %v320 = vpop.trf.xlu0
        %v321 = vpop.trf.xlu0
        %v322 = vpop.trf.xlu0
        %v323 = vadd.f32 %v289, %v307
        %v324 = vmul.f32 %v323, 0.5
        %vm325 = vcmask 64512
        %v327 = vsel %vm325, %v324, 0
        %329 = vmatprep.subr.mxu0 0.0
        %330 = vmatpush1.msra.mxu0 0.0
        %331 = vmatprep.subr.mxu0 0.0
        %332 = vmatpush1.msra.mxu0 0.0
        %333 = vmatprep.subr.mxu0 0.0
        %334 = vmatpush1.msra.mxu0 0.0
        %335 = vmatprep.subr.mxu0 0.0
        %336 = vmatpush1.msra.mxu0 0.0
        %337 = vmatprep.subr.mxu0 0.0
        %338 = vmatpush1.msra.mxu0 0.0
        %339 = vmatprep.subr.mxu0 0.0
        %340 = vmatpush1.msra.mxu0 0.0
        %341 = vmatprep.subr.mxu0 0.0
        %342 = vmatpush1.msra.mxu0 0.0
        %343 = vmatprep.subr.mxu0 0.0
        %344 = vmatpush1.msra.mxu0 0.0
        %345 = vmatprep.subr.mxu0 0.0
        %346 = vmatpush1.msra.mxu0 0.0
        %347 = vmatprep.subr.mxu0 0.0
        %348 = vmatpush1.msra.mxu0 0.0
        %349 = vmatprep.subr.mxu0 0.0
        %350 = vmatpush1.msra.mxu0 0.0
        %351 = vmatprep.subr.mxu0 0.0
        %352 = vmatpush1.msra.mxu0 0.0
        %353 = vmatprep.subr.mxu0 0.0
        %354 = vmatpush1.msra.mxu0 0.0
        %355 = vmatprep.subr.mxu0 0.0
        %356 = vmatpush1.msra.mxu0 0.0
        %357 = vmatprep.subr.mxu0 0.0
        %358 = vmatpush1.msra.mxu0 0.0
        %359 = vmatprep.subr.mxu0 0.0
        %360 = vmatpush1.msra.mxu0 %v290
        %361 = vmatprep.subr.mxu0 0.0
        %362 = vmatpush2.msra.mxu0 0.0
        %363 = vmatprep.subr.mxu0 0.0
        %364 = vmatpush2.msra.mxu0 0.0
        %365 = vmatprep.subr.mxu0 0.0
        %366 = vmatpush2.msra.mxu0 0.0
        %367 = vmatprep.subr.mxu0 0.0
        %368 = vmatpush2.msra.mxu0 0.0
        %369 = vmatprep.subr.mxu0 0.0
        %370 = vmatpush2.msra.mxu0 0.0
        %371 = vmatprep.subr.mxu0 0.0
        %372 = vmatpush2.msra.mxu0 0.0
        %373 = vmatprep.subr.mxu0 0.0
        %374 = vmatpush2.msra.mxu0 0.0
        %375 = vmatprep.subr.mxu0 0.0
        %376 = vmatpush2.msra.mxu0 0.0
        %377 = vmatprep.subr.mxu0 0.0
        %378 = vmatpush2.msra.mxu0 0.0
        %379 = vmatprep.subr.mxu0 0.0
        %380 = vmatpush2.msra.mxu0 0.0
        %381 = vmatprep.subr.mxu0 0.0
        %382 = vmatpush2.msra.mxu0 0.0
        %383 = vmatprep.subr.mxu0 0.0
        %384 = vmatpush2.msra.mxu0 0.0
        %385 = vmatprep.subr.mxu0 0.0
        %386 = vmatpush2.msra.mxu0 0.0
        %387 = vmatprep.subr.mxu0 0.0
        %388 = vmatpush2.msra.mxu0 0.0
        %389 = vmatprep.subr.mxu0 0.0
        %390 = vmatpush2.msra.mxu0 0.0
        %391 = vmatprep.subr.mxu0 0.0
        %392 = vmatpush2.msra.mxu0 0.0
        %393 = vmatprep.mubr.f32.mxu0 0.0
        %394 = vmatmul.mubr.f32.gmra.mxu0 %v327
        %v395 = vpop.f32.mrf.mxu0
        %v396 = vadd.f32 %v290, %v395
        %v397 = vpop.f32.mrf.mxu0
        %398 = vdwg.mxu0
        %v399 = vld [vmem:[#allocation5] sm:$0xff]
        %v400 = vld [vmem:[#allocation5 + $0x8] sm:$0xff]
        %v401 = vld [vmem:[#allocation5 + $0x10] sm:$0xff]
        %v402 = vld [vmem:[#allocation5 + $0x18] sm:$0xff]
        %v403 = vld [vmem:[%s3] sm:$0x7]
        %v404 = vlaneseq
        %v405 = vshrl.u32 %v404, 7
        %v406 = vsub.s32 0, %v405
        %v407 = vrot.slane %v403, %v406
        %vm408 = vcmask 261120
        %v410 = vsel %vm408, %v396, 0
        %412 = vmatprep.subr.mxu0 0.0
        %413 = vmatpush1.msra.mxu0 0.0
        %414 = vmatprep.subr.mxu0 0.0
        %415 = vmatpush1.msra.mxu0 0.0
        %416 = vmatprep.subr.mxu0 0.0
        %417 = vmatpush1.msra.mxu0 0.0
        %418 = vmatprep.subr.mxu0 0.0
        %419 = vmatpush1.msra.mxu0 0.0
        %420 = vmatprep.subr.mxu0 0.0
        %421 = vmatpush1.msra.mxu0 0.0
        %422 = vmatprep.subr.mxu0 0.0
        %423 = vmatpush1.msra.mxu0 0.0
        %424 = vmatprep.subr.mxu0 0.0
        %425 = vmatpush1.msra.mxu0 0.0
        %426 = vmatprep.subr.mxu0 0.0
        %427 = vmatpush1.msra.mxu0 0.0
        %428 = vmatprep.subr.mxu0 0.0
        %429 = vmatpush1.msra.mxu0 0.0
        %430 = vmatprep.subr.mxu0 0.0
        %431 = vmatpush1.msra.mxu0 0.0
        %432 = vmatprep.subr.mxu0 0.0
        %433 = vmatpush1.msra.mxu0 0.0
        %434 = vmatprep.subr.mxu0 0.0
        %435 = vmatpush1.msra.mxu0 0.0
        %436 = vmatprep.subr.mxu0 0.0
        %437 = vmatpush1.msra.mxu0 %v402
        %438 = vmatprep.subr.mxu0 0.0
        %439 = vmatpush1.msra.mxu0 %v401
        %440 = vmatprep.subr.mxu0 0.0
        %441 = vmatpush1.msra.mxu0 %v400
        %442 = vmatprep.subr.mxu0 0.0
        %443 = vmatpush1.msra.mxu0 %v399
        %444 = vmatprep.subr.mxu0 0.0
        %445 = vmatpush2.msra.mxu0 0.0
        %446 = vmatprep.subr.mxu0 0.0
        %447 = vmatpush2.msra.mxu0 0.0
        %448 = vmatprep.subr.mxu0 0.0
        %449 = vmatpush2.msra.mxu0 0.0
        %450 = vmatprep.subr.mxu0 0.0
        %451 = vmatpush2.msra.mxu0 0.0
        %452 = vmatprep.subr.mxu0 0.0
        %453 = vmatpush2.msra.mxu0 0.0
        %454 = vmatprep.subr.mxu0 0.0
        %455 = vmatpush2.msra.mxu0 0.0
        %456 = vmatprep.subr.mxu0 0.0
        %457 = vmatpush2.msra.mxu0 0.0
        %458 = vmatprep.subr.mxu0 0.0
        %459 = vmatpush2.msra.mxu0 0.0
        %460 = vmatprep.subr.mxu0 0.0
        %461 = vmatpush2.msra.mxu0 0.0
        %462 = vmatprep.subr.mxu0 0.0
        %463 = vmatpush2.msra.mxu0 0.0
        %464 = vmatprep.subr.mxu0 0.0
        %465 = vmatpush2.msra.mxu0 0.0
        %466 = vmatprep.subr.mxu0 0.0
        %467 = vmatpush2.msra.mxu0 0.0
        %468 = vmatprep.subr.mxu0 0.0
        %469 = vmatpush2.msra.mxu0 0.0
        %470 = vmatprep.subr.mxu0 0.0
        %471 = vmatpush2.msra.mxu0 0.0
        %472 = vmatprep.subr.mxu0 0.0
        %473 = vmatpush2.msra.mxu0 0.0
        %474 = vmatprep.subr.mxu0 0.0
        %475 = vmatpush2.msra.mxu0 0.0
        %476 = vmatprep.mubr.f32.mxu0 0.0
        %477 = vmatmul.mubr.f32.gmra.mxu0 %v410
        %v478 = vpop.f32.mrf.mxu0
        %v479 = vadd.f32 %v407, %v478
        %v480 = vpop.f32.mrf.mxu0
        %481 = vdwg.mxu0
        %v482 = vld [vmem:[%s288] sm:$0xff]
        %vm483 = vcmp.gt.f32.partialorder %v482, 0.0
        %v484 = vsel %vm483, 1, 0
        %485 = vset.pattern.permute.xlu0 0
        %486 = vperm.xlu0 %485, %v484
        %v487 = vpop.permute.xlu0 %486
        %vm488 = vcmp.eq.s32.totalorder %v487, 1
        %v489 = vsel %vm488, 0.0, %v479
        %v490 = vlaneseq
        %v491 = vand.u32 %v490, 127
        %vm492 = vcmp.lt.s32.totalorder %v491, 32
        %v493 = vsel %vm492, 1, 0
        %vm494 = vcmp.eq.s32.totalorder %v493, 1
        %v495 = vsel %vm494, %v489, 0.0
        %496 = vadd.xlane.f32.xlu0 %v495
        %v497 = vpop.xlane.xlu0 %496
        %v498 = vmul.f32 %v497, 0.03125
        %v499 = vsub.f32 %v489, %v498
        %v500 = vsel %vm494, %v499, 0.0
        %v501 = vmul.f32 %v500, %v500
        %502 = vadd.xlane.f32.xlu0 %v501
        %v503 = vpop.xlane.xlu0 %502
        %v504 = vmul.f32 %v503, 0.03125
        %v505 = vadd.f32 %v504, 1e-05
        %v506 = vrsqrt.pop %v505
        %v507 = vmul.f32 %v500, %v506
        %v508 = vlaneseq
        %v509 = vshrl.u32 %v508, 7
        %v510 = vsub.s32 1, %v509
        %v511 = vrot.slane %v403, %v510
        %v512 = vmul.f32 %v507, %v511
        %v513 = vlaneseq
        %v514 = vshrl.u32 %v513, 7
        %v515 = vsub.s32 2, %v514
        %v516 = vrot.slane %v403, %v515
        %v517 = vadd.f32 %v512, %v516
        %v518 = vmax.f32 %v517, 0.0
        %519 = vst [vmem:[%s280] sm:$0xff] %v518
        %s520 = sand.u32 %s151, 1
        %s521 = scalar_lea.sflag [#allocation4], %s520
        %s522 = sand.u32 %s151, 1
        %s523 = smul.addr %s522, 8
        %s524 = scalar_lea.vmem [#allocation7], %s523
        // Predicated region
        $region49: #{tpu_custom_call.1} parent=39 // pred_check
          %p525 = pneg %p161
        $region50: #{tpu_custom_call.1} parent=39 // pred_check_branch
          %527 = sbr.rel (%p525) target = $region52
        $region51: #{tpu_custom_call.1} parent=39 // pred_region
          %s529 = ssub.s32 128, 128
          %530 = vsyncadd %s521, %s529
          %s531 = smul.addr %s23, 128
          %s532 = scalar_lea.hbm %s5, %s531
          %s534 = sshll.u32 %s524, 4
          %s535 = int_to_ptr.vmem [resolvable:$true] %s534
          %537 = dma.vmem_to_hbm [thread:$0]  %s535, 128, %s532, %s521
        $region52: #{tpu_custom_call.1} parent=39 // pred_fallthru
          _
      $region40: #{tpu_custom_call.1} parent=5 // pred_fallthru
        _
      %p538 = scmp.le.s32.totalorder 2, %s18
      // Predicated region
      $region53: #{tpu_custom_call.1} parent=5 // pred_check
        %p539 = pneg %p538
      $region54: #{tpu_custom_call.1} parent=5 // pred_check_branch
        %541 = sbr.rel (%p539) target = $region56
      $region55: #{tpu_custom_call.1} parent=5 // pred_region
        %s542 = ssub.s32 %s18, 2
        // Predicated region
        $region57: #{tpu_custom_call.1} parent=55 // pred_check
          %p543 = pneg %p167
        $region58: #{tpu_custom_call.1} parent=55 // pred_check_branch
          %545 = sbr.rel (%p543) target = $region60
        $region59: #{tpu_custom_call.1} parent=55 // pred_region
          %s546 = sand.u32 %s152, 1
          %s547 = scalar_lea.sflag [#allocation4], %s546
          %s548 = sand.u32 %s152, 1
          %s549 = smul.addr %s548, 8
          %s550 = scalar_lea.vmem [#allocation7], %s549
          %551 = dma.done %s547, 128
        $region60: #{tpu_custom_call.1} parent=55 // pred_fallthru
          _
      $region56: #{tpu_custom_call.1} parent=5 // pred_fallthru
        _
    $region6: #{tpu_custom_call.1} parent=1 // loop_footer
      %s22 = sadd.s32 1, %s18
    $region7: #{tpu_custom_call.1} parent=1 // loop_footer_branch
      %17 = sbr.rel target = $region3
    $region8: #{tpu_custom_call.1} parent=1 // loop_exit
      _
    %552 = vsyncpa [#allocation3], 1
    %s553 = scalar_lea.sflag [#allocation3], 1
    %554 = vsyncpa %s553, 1
    %555 = vsyncpa [#allocation6], 1
    %556 = vsyncpa [#allocation4], 1
    %s557 = scalar_lea.sflag [#allocation4], 1
    %558 = vsyncpa %s557, 1

</llo_original>
